<compile_context>
chip_gen: v7x
topology: tpu7x:2x2x1
jax: 0.10.0
libtpu: 0.0.40
codegen_flags: <defaults>
</compile_context>

<pallas_src>
import jax
import jax.numpy as jnp
from jax import lax
from jax.experimental import pallas as pl
from jax.experimental.pallas import tpu as pltpu


def _transe_gather_kernel(h_idx_ref, r_idx_ref, t_idx_ref,   # SMEM (scalar prefetch)
                          ent_hbm, rel_vmem,                  # HBM ent table, VMEM rel table
                          h_out, r_out, t_out,                # VMEM (block_b, D) outputs
                          sems):                              # DMA semaphore pool (2, W)
    tb = h_out.shape[0]          # rows per batch tile (static)
    W = sems.shape[1]            # in-flight DMA window per stream (static, W <= tb)
    base = pl.program_id(0) * tb

    def issue(j):
        """Start the h/t row gathers for batch row j (DMA straight into outputs)."""
        slot = j % W
        h_row = h_idx_ref[base + j]
        t_row = t_idx_ref[base + j]
        pltpu.make_async_copy(ent_hbm.at[pl.ds(h_row, 1), :],
                              h_out.at[pl.ds(j, 1), :],
                              sems.at[0, slot]).start()
        pltpu.make_async_copy(ent_hbm.at[pl.ds(t_row, 1), :],
                              t_out.at[pl.ds(j, 1), :],
                              sems.at[1, slot]).start()

    def wait(j):
        """Wait for row j's gathers. Source index is irrelevant for the wait
        (only sizes + semaphore matter), so no SMEM re-reads here."""
        slot = j % W
        pltpu.make_async_copy(ent_hbm.at[pl.ds(0, 1), :],
                              h_out.at[pl.ds(j, 1), :],
                              sems.at[0, slot]).wait()
        pltpu.make_async_copy(ent_hbm.at[pl.ds(0, 1), :],
                              t_out.at[pl.ds(j, 1), :],
                              sems.at[1, slot]).wait()

    # Prime the in-flight window (W <= tb is guaranteed by the wrapper).
    def prime_body(j, c):
        issue(j)
        return c
    lax.fori_loop(0, W, prime_body, 0)

    # Steady state: wait row j, refill the window with row j + W, and service
    # the relation lookup for row j as a cheap in-VMEM dynamic row copy.
    def body(j, c):
        wait(j)

        @pl.when(j + W < tb)
        def _():
            issue(j + W)

        r_row = r_idx_ref[base + j]
        r_out[pl.ds(j, 1), :] = rel_vmem[pl.ds(r_row, 1), :]
        return c
    lax.fori_loop(0, tb, body, 0)


def transe_forward(ent_table, rel_table, h_idx, r_idx, t_idx, *,
                   block_b=256, dma_window=32):
    """Returns (ent[h], rel[r], ent[t]) — same semantics as TransEModel.forward."""
    B = h_idx.shape[0]
    E, D = ent_table.shape
    R, Dr = rel_table.shape
    assert D == Dr, "entity / relation embedding dims must match"

    # Tile size: multiple of 8, no larger than the padded batch.
    b_round8 = -(-B // 8) * 8
    block_b = max(8, min(int(block_b), b_round8))
    num_tiles = -(-B // block_b)
    B_pad = num_tiles * block_b
    W = max(1, min(int(dma_window), block_b))

    # Clamp indices (an OOB index would drive a DMA from an arbitrary HBM
    # offset) and pad the batch to a whole number of tiles.
    def prep(idx, hi):
        idx = jnp.clip(idx.astype(jnp.int32), 0, hi - 1)
        if B_pad != B:
            idx = jnp.concatenate([idx, jnp.zeros((B_pad - B,), jnp.int32)])
        return idx

    h_p = prep(h_idx, E)
    r_p = prep(r_idx, R)
    t_p = prep(t_idx, E)

    out_map = lambda i, h, r, t: (i, 0)   # index_maps also receive prefetch refs
    rel_map = lambda i, h, r, t: (0, 0)   # relation table: same full block every step

    grid_spec = pltpu.PrefetchScalarGridSpec(
        num_scalar_prefetch=3,
        grid=(num_tiles,),
        in_specs=[
            pl.BlockSpec(memory_space=pl.ANY),   # entity table stays in HBM
            pl.BlockSpec((R, D), rel_map),       # relation table resident in VMEM
        ],
        out_specs=(
            pl.BlockSpec((block_b, D), out_map),
            pl.BlockSpec((block_b, D), out_map),
            pl.BlockSpec((block_b, D), out_map),
        ),
        scratch_shapes=[pltpu.SemaphoreType.DMA((2, W))],
    )

    itemsize = jnp.dtype(ent_table.dtype).itemsize
    cost = pl.CostEstimate(
        flops=0,
        transcendentals=0,
        bytes_accessed=int(2 * 3 * B_pad * D * itemsize),
    )

    h_e, r_e, t_e = pl.pallas_call(
        _transe_gather_kernel,
        out_shape=(
            jax.ShapeDtypeStruct((B_pad, D), ent_table.dtype),
            jax.ShapeDtypeStruct((B_pad, D), rel_table.dtype),
            jax.ShapeDtypeStruct((B_pad, D), ent_table.dtype),
        ),
        grid_spec=grid_spec,
        compiler_params=pltpu.CompilerParams(
            dimension_semantics=("parallel",)),
        cost_estimate=cost,
    )(h_p, r_p, t_p, ent_table, rel_table)

    return h_e[:B], r_e[:B], t_e[:B]


def transe_reference(ent_table, rel_table, h_idx, r_idx, t_idx):
    return ent_table[h_idx], rel_table[r_idx], ent_table[t_idx]


if __name__ == "__main__":
    num_entities = 64
    num_relations = 16
    embed_dim = 128     # lane-aligned
    batch = 64          # -> 2 batch tiles of 32 rows (even tile count for v7x)

    key = jax.random.PRNGKey(0)
    k1, k2, k3, k4, k5 = jax.random.split(key, 5)

    # nn.Embedding default init ~ N(0, 1). zero_const / pi_const are unused in forward.
    ent_table = jax.random.normal(k1, (num_entities, embed_dim), jnp.float32)
    rel_table = jax.random.normal(k2, (num_relations, embed_dim), jnp.float32)

    h_idx = jax.random.randint(k3, (batch,), 0, num_entities, jnp.int32)
    r_idx = jax.random.randint(k4, (batch,), 0, num_relations, jnp.int32)
    t_idx = jax.random.randint(k5, (batch,), 0, num_entities, jnp.int32)

    outs = transe_forward(ent_table, rel_table, h_idx, r_idx, t_idx,
                          block_b=32, dma_window=16)
    outs = jax.block_until_ready(outs)

    refs = transe_reference(ent_table, rel_table, h_idx, r_idx, t_idx)
    for o, ref in zip(outs, refs):
        assert o.shape == ref.shape
        assert jnp.allclose(o, ref, atol=1e-6, rtol=0.0)

    print("KERNEL_OK")
</pallas_src>

<mosaic_0001>
module attributes {stable_mosaic.version = 11 : i64} {
  func.func @_transe_gather_kernel(%arg0: i32, %arg1: memref<64xi32, #tpu.memory_space<smem>>, %arg2: memref<64xi32, #tpu.memory_space<smem>>, %arg3: memref<64xi32, #tpu.memory_space<smem>>, %arg4: memref<64x128xf32, #tpu.memory_space<any>>, %arg5: memref<16x128xf32, #tpu.memory_space<vmem>>, %arg6: memref<32x128xf32, #tpu.memory_space<vmem>>, %arg7: memref<32x128xf32, #tpu.memory_space<vmem>>, %arg8: memref<32x128xf32, #tpu.memory_space<vmem>>, %arg9: memref<2x16x!tpu.dma_semaphore, #tpu.memory_space<semaphore_mem>>) attributes {dimension_semantics = [#tpu.dimension_semantics<parallel>], iteration_bounds = array<i64: 2>, scalar_prefetch = 3 : i64, scratch_operands = 1 : i64, tpu.core_type = #tpu.core_type<tc>, window_params = [{}, {pipeline_mode = #tpu.pipeline_mode<synchronous>, transform_indices = @transform_1, window_bounds = array<i64: 16, 128>}, {transform_indices = @transform_2, window_bounds = array<i64: 32, 128>}, {transform_indices = @transform_3, window_bounds = array<i64: 32, 128>}, {transform_indices = @transform_4, window_bounds = array<i64: 32, 128>}]} {
    %c32_i32 = arith.constant 32 : i32
    %0 = arith.muli %arg0, %c32_i32 : i32
    %c0_i32 = arith.constant 0 : i32
    %c16_i32 = arith.constant 16 : i32
    %1 = arith.addi %c0_i32, %c16_i32 : i32
    %c1_i32 = arith.constant 1 : i32
    scf.for %arg10 = %c0_i32 to %1 step %c1_i32  : i32 {
      %c16_i32_5 = arith.constant 16 : i32
      %c0_i32_6 = arith.constant 0 : i32
      %3 = arith.cmpi eq, %c16_i32_5, %c0_i32_6 : i32
      %c1_i32_7 = arith.constant 1 : i32
      %4 = arith.select %3, %c1_i32_7, %c16_i32_5 : i32
      %5 = arith.remsi %arg10, %4 : i32
      %c0_i32_8 = arith.constant 0 : i32
      %6 = arith.cmpi ne, %5, %c0_i32_8 : i32
      %c0_i32_9 = arith.constant 0 : i32
      %7 = arith.cmpi slt, %5, %c0_i32_9 : i32
      %c0_i32_10 = arith.constant 0 : i32
      %8 = arith.cmpi slt, %4, %c0_i32_10 : i32
      %9 = arith.xori %7, %8 : i1
      %10 = arith.andi %9, %6 : i1
      %11 = arith.addi %5, %4 : i32
      %12 = arith.select %10, %11, %5 : i32
      %13 = arith.addi %0, %arg10 : i32
      %14 = arith.index_cast %13 : i32 to index
      %15 = memref.load %arg1[%14] : memref<64xi32, #tpu.memory_space<smem>>
      %16 = arith.addi %0, %arg10 : i32
      %17 = arith.index_cast %16 : i32 to index
      %18 = memref.load %arg3[%17] : memref<64xi32, #tpu.memory_space<smem>>
      %c0_i32_11 = arith.constant 0 : i32
      %c0_i32_12 = arith.constant 0 : i32
      %19 = tpu.memref_slice %arg4[%15, %c0_i32_12] : memref<64x128xf32, #tpu.memory_space<any>> -> memref<1x128xf32, #tpu.memory_space<any>>
      %c0_i32_13 = arith.constant 0 : i32
      %20 = tpu.memref_slice %arg6[%arg10, %c0_i32_13] : memref<32x128xf32, #tpu.memory_space<vmem>> -> memref<1x128xf32, #tpu.memory_space<vmem>>
      %21 = tpu.memref_slice %arg9[%c0_i32_11, %12] : memref<2x16x!tpu.dma_semaphore, #tpu.memory_space<semaphore_mem>> -> memref<1x1x!tpu.dma_semaphore, #tpu.memory_space<semaphore_mem>>
      %22 = tpu.memref_squeeze %21 : memref<1x1x!tpu.dma_semaphore, #tpu.memory_space<semaphore_mem>> -> memref<!tpu.dma_semaphore, #tpu.memory_space<semaphore_mem>>
      tpu.enqueue_dma source(%19 : memref<1x128xf32, #tpu.memory_space<any>>) target(%20 : memref<1x128xf32, #tpu.memory_space<vmem>>) target_semaphore(%22 : memref<!tpu.dma_semaphore, #tpu.memory_space<semaphore_mem>>)
      %c1_i32_14 = arith.constant 1 : i32
      %c0_i32_15 = arith.constant 0 : i32
      %23 = tpu.memref_slice %arg4[%18, %c0_i32_15] : memref<64x128xf32, #tpu.memory_space<any>> -> memref<1x128xf32, #tpu.memory_space<any>>
      %c0_i32_16 = arith.constant 0 : i32
      %24 = tpu.memref_slice %arg8[%arg10, %c0_i32_16] : memref<32x128xf32, #tpu.memory_space<vmem>> -> memref<1x128xf32, #tpu.memory_space<vmem>>
      %25 = tpu.memref_slice %arg9[%c1_i32_14, %12] : memref<2x16x!tpu.dma_semaphore, #tpu.memory_space<semaphore_mem>> -> memref<1x1x!tpu.dma_semaphore, #tpu.memory_space<semaphore_mem>>
      %26 = tpu.memref_squeeze %25 : memref<1x1x!tpu.dma_semaphore, #tpu.memory_space<semaphore_mem>> -> memref<!tpu.dma_semaphore, #tpu.memory_space<semaphore_mem>>
      tpu.enqueue_dma source(%23 : memref<1x128xf32, #tpu.memory_space<any>>) target(%24 : memref<1x128xf32, #tpu.memory_space<vmem>>) target_semaphore(%26 : memref<!tpu.dma_semaphore, #tpu.memory_space<semaphore_mem>>)
    }
    %c16_i32_0 = arith.constant 16 : i32
    %c0_i32_1 = arith.constant 0 : i32
    %c32_i32_2 = arith.constant 32 : i32
    %2 = arith.addi %c0_i32_1, %c32_i32_2 : i32
    %c1_i32_3 = arith.constant 1 : i32
    scf.for %arg10 = %c0_i32_1 to %2 step %c1_i32_3  : i32 {
      %c16_i32_5 = arith.constant 16 : i32
      %c0_i32_6 = arith.constant 0 : i32
      %3 = arith.cmpi eq, %c16_i32_5, %c0_i32_6 : i32
      %c1_i32_7 = arith.constant 1 : i32
      %4 = arith.select %3, %c1_i32_7, %c16_i32_5 : i32
      %5 = arith.remsi %arg10, %4 : i32
      %c0_i32_8 = arith.constant 0 : i32
      %6 = arith.cmpi ne, %5, %c0_i32_8 : i32
      %c0_i32_9 = arith.constant 0 : i32
      %7 = arith.cmpi slt, %5, %c0_i32_9 : i32
      %c0_i32_10 = arith.constant 0 : i32
      %8 = arith.cmpi slt, %4, %c0_i32_10 : i32
      %9 = arith.xori %7, %8 : i1
      %10 = arith.andi %9, %6 : i1
      %11 = arith.addi %5, %4 : i32
      %12 = arith.select %10, %11, %5 : i32
      %c0_i32_11 = arith.constant 0 : i32
      %c0_i32_12 = arith.constant 0 : i32
      %c0_i32_13 = arith.constant 0 : i32
      %13 = tpu.memref_slice %arg4[%c0_i32_12, %c0_i32_13] : memref<64x128xf32, #tpu.memory_space<any>> -> memref<1x128xf32, #tpu.memory_space<any>>
      %c0_i32_14 = arith.constant 0 : i32
      %14 = tpu.memref_slice %arg6[%arg10, %c0_i32_14] : memref<32x128xf32, #tpu.memory_space<vmem>> -> memref<1x128xf32, #tpu.memory_space<vmem>>
      %15 = tpu.memref_slice %arg9[%c0_i32_11, %12] : memref<2x16x!tpu.dma_semaphore, #tpu.memory_space<semaphore_mem>> -> memref<1x1x!tpu.dma_semaphore, #tpu.memory_space<semaphore_mem>>
      %16 = tpu.memref_squeeze %15 : memref<1x1x!tpu.dma_semaphore, #tpu.memory_space<semaphore_mem>> -> memref<!tpu.dma_semaphore, #tpu.memory_space<semaphore_mem>>
      tpu.wait_dma2 semaphore(%16 : memref<!tpu.dma_semaphore, #tpu.memory_space<semaphore_mem>>) src(%13 : memref<1x128xf32, #tpu.memory_space<any>>) dst(%14 : memref<1x128xf32, #tpu.memory_space<vmem>>)
      %c1_i32_15 = arith.constant 1 : i32
      %c0_i32_16 = arith.constant 0 : i32
      %c0_i32_17 = arith.constant 0 : i32
      %17 = tpu.memref_slice %arg4[%c0_i32_16, %c0_i32_17] : memref<64x128xf32, #tpu.memory_space<any>> -> memref<1x128xf32, #tpu.memory_space<any>>
      %c0_i32_18 = arith.constant 0 : i32
      %18 = tpu.memref_slice %arg8[%arg10, %c0_i32_18] : memref<32x128xf32, #tpu.memory_space<vmem>> -> memref<1x128xf32, #tpu.memory_space<vmem>>
      %19 = tpu.memref_slice %arg9[%c1_i32_15, %12] : memref<2x16x!tpu.dma_semaphore, #tpu.memory_space<semaphore_mem>> -> memref<1x1x!tpu.dma_semaphore, #tpu.memory_space<semaphore_mem>>
      %20 = tpu.memref_squeeze %19 : memref<1x1x!tpu.dma_semaphore, #tpu.memory_space<semaphore_mem>> -> memref<!tpu.dma_semaphore, #tpu.memory_space<semaphore_mem>>
      tpu.wait_dma2 semaphore(%20 : memref<!tpu.dma_semaphore, #tpu.memory_space<semaphore_mem>>) src(%17 : memref<1x128xf32, #tpu.memory_space<any>>) dst(%18 : memref<1x128xf32, #tpu.memory_space<vmem>>)
      %c16_i32_19 = arith.constant 16 : i32
      %21 = arith.addi %arg10, %c16_i32_19 : i32
      %c32_i32_20 = arith.constant 32 : i32
      %22 = arith.cmpi slt, %21, %c32_i32_20 : i32
      %23 = arith.extui %22 : i1 to i32
      %c0_i32_21 = arith.constant 0 : i32
      %24 = arith.cmpi ne, %23, %c0_i32_21 : i32
      scf.if %24 {
        %c16_i32_23 = arith.constant 16 : i32
        %32 = arith.addi %arg10, %c16_i32_23 : i32
        %c16_i32_24 = arith.constant 16 : i32
        %c0_i32_25 = arith.constant 0 : i32
        %33 = arith.cmpi eq, %c16_i32_24, %c0_i32_25 : i32
        %c1_i32_26 = arith.constant 1 : i32
        %34 = arith.select %33, %c1_i32_26, %c16_i32_24 : i32
        %35 = arith.remsi %32, %34 : i32
        %c0_i32_27 = arith.constant 0 : i32
        %36 = arith.cmpi ne, %35, %c0_i32_27 : i32
        %c0_i32_28 = arith.constant 0 : i32
        %37 = arith.cmpi slt, %35, %c0_i32_28 : i32
        %c0_i32_29 = arith.constant 0 : i32
        %38 = arith.cmpi slt, %34, %c0_i32_29 : i32
        %39 = arith.xori %37, %38 : i1
        %40 = arith.andi %39, %36 : i1
        %41 = arith.addi %35, %34 : i32
        %42 = arith.select %40, %41, %35 : i32
        %43 = arith.addi %0, %32 : i32
        %44 = arith.index_cast %43 : i32 to index
        %45 = memref.load %arg1[%44] : memref<64xi32, #tpu.memory_space<smem>>
        %46 = arith.addi %0, %32 : i32
        %47 = arith.index_cast %46 : i32 to index
        %48 = memref.load %arg3[%47] : memref<64xi32, #tpu.memory_space<smem>>
        %c0_i32_30 = arith.constant 0 : i32
        %c0_i32_31 = arith.constant 0 : i32
        %49 = tpu.memref_slice %arg4[%45, %c0_i32_31] : memref<64x128xf32, #tpu.memory_space<any>> -> memref<1x128xf32, #tpu.memory_space<any>>
        %c0_i32_32 = arith.constant 0 : i32
        %50 = tpu.memref_slice %arg6[%32, %c0_i32_32] : memref<32x128xf32, #tpu.memory_space<vmem>> -> memref<1x128xf32, #tpu.memory_space<vmem>>
        %51 = tpu.memref_slice %arg9[%c0_i32_30, %42] : memref<2x16x!tpu.dma_semaphore, #tpu.memory_space<semaphore_mem>> -> memref<1x1x!tpu.dma_semaphore, #tpu.memory_space<semaphore_mem>>
        %52 = tpu.memref_squeeze %51 : memref<1x1x!tpu.dma_semaphore, #tpu.memory_space<semaphore_mem>> -> memref<!tpu.dma_semaphore, #tpu.memory_space<semaphore_mem>>
        tpu.enqueue_dma source(%49 : memref<1x128xf32, #tpu.memory_space<any>>) target(%50 : memref<1x128xf32, #tpu.memory_space<vmem>>) target_semaphore(%52 : memref<!tpu.dma_semaphore, #tpu.memory_space<semaphore_mem>>)
        %c1_i32_33 = arith.constant 1 : i32
        %c0_i32_34 = arith.constant 0 : i32
        %53 = tpu.memref_slice %arg4[%48, %c0_i32_34] : memref<64x128xf32, #tpu.memory_space<any>> -> memref<1x128xf32, #tpu.memory_space<any>>
        %c0_i32_35 = arith.constant 0 : i32
        %54 = tpu.memref_slice %arg8[%32, %c0_i32_35] : memref<32x128xf32, #tpu.memory_space<vmem>> -> memref<1x128xf32, #tpu.memory_space<vmem>>
        %55 = tpu.memref_slice %arg9[%c1_i32_33, %42] : memref<2x16x!tpu.dma_semaphore, #tpu.memory_space<semaphore_mem>> -> memref<1x1x!tpu.dma_semaphore, #tpu.memory_space<semaphore_mem>>
        %56 = tpu.memref_squeeze %55 : memref<1x1x!tpu.dma_semaphore, #tpu.memory_space<semaphore_mem>> -> memref<!tpu.dma_semaphore, #tpu.memory_space<semaphore_mem>>
        tpu.enqueue_dma source(%53 : memref<1x128xf32, #tpu.memory_space<any>>) target(%54 : memref<1x128xf32, #tpu.memory_space<vmem>>) target_semaphore(%56 : memref<!tpu.dma_semaphore, #tpu.memory_space<semaphore_mem>>)
      } else {
      }
      %25 = arith.addi %0, %arg10 : i32
      %26 = arith.index_cast %25 : i32 to index
      %27 = memref.load %arg2[%26] : memref<64xi32, #tpu.memory_space<smem>>
      %28 = arith.index_cast %27 : i32 to index
      %c0 = arith.constant 0 : index
      %29 = vector.load %arg5[%28, %c0] : memref<16x128xf32, #tpu.memory_space<vmem>>, vector<1x128xf32>
      %30 = arith.index_cast %arg10 : i32 to index
      %c0_22 = arith.constant 0 : index
      %31 = vector.load %arg7[%30, %c0_22] : memref<32x128xf32, #tpu.memory_space<vmem>>, vector<1x128xf32>
      tpu.vector_store %arg7[%30, %c0_22], %29 {strides = array<i32>} : memref<32x128xf32, #tpu.memory_space<vmem>>, vector<1x128xf32>,
    }
    %c32_i32_4 = arith.constant 32 : i32
    return
  }
  func.func @transform_1(%arg0: i32, %arg1: memref<64xi32, #tpu.memory_space<smem>>, %arg2: memref<64xi32, #tpu.memory_space<smem>>, %arg3: memref<64xi32, #tpu.memory_space<smem>>) -> (i32, i32) {
    %c0_i32 = arith.constant 0 : i32
    %c0_i32_0 = arith.constant 0 : i32
    %c0_i32_1 = arith.constant 0 : i32
    return %c0_i32, %c0_i32_0 : i32, i32
  }
  func.func @transform_2(%arg0: i32, %arg1: memref<64xi32, #tpu.memory_space<smem>>, %arg2: memref<64xi32, #tpu.memory_space<smem>>, %arg3: memref<64xi32, #tpu.memory_space<smem>>) -> (i32, i32) {
    %c0_i32 = arith.constant 0 : i32
    %c0_i32_0 = arith.constant 0 : i32
    return %arg0, %c0_i32 : i32, i32
  }
  func.func @transform_3(%arg0: i32, %arg1: memref<64xi32, #tpu.memory_space<smem>>, %arg2: memref<64xi32, #tpu.memory_space<smem>>, %arg3: memref<64xi32, #tpu.memory_space<smem>>) -> (i32, i32) {
    %c0_i32 = arith.constant 0 : i32
    %c0_i32_0 = arith.constant 0 : i32
    return %arg0, %c0_i32 : i32, i32
  }
  func.func @transform_4(%arg0: i32, %arg1: memref<64xi32, #tpu.memory_space<smem>>, %arg2: memref<64xi32, #tpu.memory_space<smem>>, %arg3: memref<64xi32, #tpu.memory_space<smem>>) -> (i32, i32) {
    %c0_i32 = arith.constant 0 : i32
    %c0_i32_0 = arith.constant 0 : i32
    return %arg0, %c0_i32 : i32, i32
  }
}

</mosaic_0001>

<llo_original>
// kernel: tpu_custom_call.1
$region0: #{tpu_custom_call.1}
  #allocation0 [shape = 'u32[]', space=smem, size = 0x4, offset = 0x4, fixed_abs, tag = 'smem constant byte address 0x4 - core index']
  #allocation1 [shape = 'u32[144,128]{1,0:T(1,128)}', space=vmem, size = 0x12000, scoped, tag = 'internal scratch']
  #allocation2 [shape = 's32[32]{0}', space=sflag, size = 0x80, scoped, tag = 'scratch operand']
  #allocation3 [shape = 's32[1]{0}', space=sflag, size = 0x4, scoped, tag = 'scoped memory for tpu_custom_call.1']
  #allocation4 [shape = 'u8[512]{0}', space=smem, size = 0x200, scoped, tag = 'prefetched SMEM operand 0']
  #allocation5 [shape = 'u8[512]{0}', space=smem, size = 0x200, scoped, tag = 'prefetched SMEM operand 1']
  #allocation6 [shape = 'u8[512]{0}', space=smem, size = 0x200, scoped, tag = 'prefetched SMEM operand 2']
  #allocation14 [shape = 's32[]', space=sflag, size = 0x4, offset = 0, fixed_abs, tag = 'sflag constant byte address 0x0 - dummy sync flag']
  #allocation15 [shape = 's32[]', space=sflag, size = 0x4, offset = 0, fixed_abs, tag = 'sflag constant byte address 0x0 - dummy sync flag']
  #allocation16 [shape = 'u32[]', space=smem, size = 0x4, offset = 0x44, fixed_abs, tag = 'smem constant byte address 0x44 - assertion arg 0']
  #allocation17 [shape = 'u32[]', space=smem, size = 0x4, offset = 0x48, fixed_abs, tag = 'smem constant byte address 0x48 - assertion arg 1']
  #allocation18 [shape = 's32[]', space=sflag, size = 0x4, offset = 0, fixed_abs, tag = 'sflag constant byte address 0x0 - dummy sync flag']
  #allocation19 [shape = 's32[]', space=sflag, size = 0x4, offset = 0, fixed_abs, tag = 'sflag constant byte address 0x0 - dummy sync flag']
  #allocation20 [shape = 's32[]', space=sflag, size = 0x4, offset = 0, fixed_abs, tag = 'sflag constant byte address 0x0 - dummy sync flag']
  #allocation21 [shape = 's32[]', space=sflag, size = 0x4, offset = 0, fixed_abs, tag = 'sflag constant byte address 0x0 - dummy sync flag']
  #allocation22 [shape = 's32[]', space=sflag, size = 0x4, offset = 0, fixed_abs, tag = 'sflag constant byte address 0x0 - dummy sync flag']
  #allocation23 [shape = 's32[]', space=sflag, size = 0x4, offset = 0, fixed_abs, tag = 'sflag constant byte address 0x0 - dummy sync flag']
  %s0 = inlined_call_operand.hbm [shape: s32[64], index: 0, kind: input, shape index: {}]
  %s1 = inlined_call_operand.vmem [shape: s32[64], index: 1, kind: input, shape index: {}]
  %s2 = inlined_call_operand.vmem [shape: s32[64], index: 2, kind: input, shape index: {}]
  %s3 = inlined_call_operand.hbm [shape: f32[64,128], index: 3, kind: input, shape index: {}]
  %s4 = inlined_call_operand.hbm [shape: f32[16,128], index: 4, kind: input, shape index: {}]
  %s5 = inlined_call_operand.hbm [shape: f32[64,128], index: 5, kind: output, shape index: {0}]
  %s6 = inlined_call_operand.hbm [shape: f32[64,128], index: 6, kind: output, shape index: {1}]
  %s7 = inlined_call_operand.hbm [shape: f32[64,128], index: 7, kind: output, shape index: {2}]
  %8 = xla_tuple %s5, %s6, %s7
  %s9 = sld [smem:[#allocation0]]
  $region91: #{tpu_custom_call.1} parent=0
    _
  %s11 = ssub.s32 1, %s9
  %s12 = scalar_select 0, %s11, %s9
  %14 = dma.hbm_to_smem %s0, 16, [#allocation4], [#allocation3]
  %s15 = sshll.u32 %s1, 4
  %s16 = int_to_ptr.vmem [resolvable:$true] %s15
  %18 = dma.vmem_to_smem %s16, 16, [#allocation5], [#allocation3]
  %s19 = sshll.u32 %s2, 4
  %s20 = int_to_ptr.vmem [resolvable:$true] %s19
  %22 = dma.vmem_to_smem %s20, 16, [#allocation6], [#allocation3]
  %23 = dma.done [#allocation3], 48
  %24 = sfence
  $region1: #{tpu_custom_call.1} parent=0
    #allocation7 [shape = 'u8[8192]{0}', space=vmem, size = 0x2000, scoped, tag = 'input window, operand 4, single buffered']
    #allocation8 [shape = 's32[2]{0}', space=sflag, size = 0x8, scoped, tag = 'scoped memory for tpu_custom_call.1']
    #allocation9 [shape = 's32[2]{0}', space=sflag, size = 0x8, scoped, tag = 'scoped memory for tpu_custom_call.1']
    #allocation10 [shape = 'u8[32768]{0}', space=vmem, size = 0x8000, scoped, tag = 'output window, operand 0']
    #allocation11 [shape = 'u8[32768]{0}', space=vmem, size = 0x8000, scoped, tag = 'output window, operand 1']
    #allocation12 [shape = 's32[2]{0}', space=sflag, size = 0x8, scoped, tag = 'scoped memory for tpu_custom_call.1']
    #allocation13 [shape = 'u8[32768]{0}', space=vmem, size = 0x8000, scoped, tag = 'output window, operand 2']
    %25 = vsyncpa [#allocation8], 0
    %26 = vsyncpa [#allocation9], 0
    %s27 = scalar_lea.sflag [#allocation9], 1
    %28 = vsyncpa %s27, 0
    %29 = vsyncpa [#allocation12], 0
    %s30 = scalar_lea.sflag [#allocation12], 1
    %31 = vsyncpa %s30, 0
    loop: start=0, step=1, limit=4
    $region2: #{tpu_custom_call.1} parent=1 // loop_pre_header
      _
    $region3: #{tpu_custom_call.1} parent=1 // loop_header
      %s33 = sphi 0, %s37
      %p34 = scmp.ge.s32.totalorder %s33, 4
      %s41 = sphi 0, %s41
      %s43 = sphi 0, %s41
      %s44 = sphi 0, %s43
      %s58 = sphi 0, %s44
      %s64 = sphi 0, %s66
      %s67 = sphi 0, %s64
      %s68 = sphi 0, %s67
      %s84 = sphi 0, %s68
      %s90 = sphi 0, %s92
      %s93 = sphi 0, %s90
      %s94 = sphi 0, %s93
      %s110 = sphi 0, %s94
      %s116 = sphi 0, %s118
      %s119 = sphi 0, %s116
      %s120 = sphi 0, %s119
      %s136 = sphi 0, %s120
    $region4: #{tpu_custom_call.1} parent=1 // loop_header_branch
      %36 = sbr.rel (%p34) target = $region8
    $region5: #{tpu_custom_call.1} parent=1 // loop_body
      %s38 = ssub.s32 %s33, 1
      %s39 = ssub.s32 %s33, 2
      %s40 = sadd.s32 %s33, 1
      %s42 = sadd.s32 %s41, 1
      %p45 = scmp.eq.s32.totalorder %s33, 1
      %p46 = scmp.ne.s32.totalorder %s41, %s43
      %p47 = scmp.eq.s32.totalorder %s33, 0
      %p48 = por %p46, %p47
      %p49 = scmp.ne.s32.totalorder %s41, %s43
      %p50 = scmp.eq.s32.totalorder %s38, 1
      %p51 = por %p49, %p50
      %p52 = scmp.ne.s32.totalorder %s43, %s44
      %p53 = scmp.eq.s32.totalorder %s38, 0
      %p54 = por %p52, %p53
      %p55 = scmp.ne.s32.totalorder %s43, %s44
      %p56 = scmp.eq.s32.totalorder %s39, 1
      %p57 = por %p55, %p56
      %p59 = scmp.ne.s32.totalorder %s44, %s58
      %p60 = scmp.eq.s32.totalorder %s39, 0
      %p61 = por %p59, %p60
      %s62 = ssub.s32 %s33, %s40
      %p63 = scmp.eq.s32.totalorder %s62, 0
      %s65 = sadd.s32 %s64, 1
      %s66 = scalar_select %p63, %s64, %s65
      %p69 = pneg %p63
      %p70 = scmp.eq.s32.totalorder %s33, 1
      %p71 = por %p69, %p70
      %p72 = scmp.ne.s32.totalorder %s64, %s67
      %p73 = scmp.eq.s32.totalorder %s33, 0
      %p74 = por %p72, %p73
      %p75 = scmp.ne.s32.totalorder %s64, %s67
      %p76 = scmp.eq.s32.totalorder %s38, 1
      %p77 = por %p75, %p76
      %p78 = scmp.ne.s32.totalorder %s67, %s68
      %p79 = scmp.eq.s32.totalorder %s38, 0
      %p80 = por %p78, %p79
      %p81 = scmp.ne.s32.totalorder %s67, %s68
      %p82 = scmp.eq.s32.totalorder %s39, 1
      %p83 = por %p81, %p82
      %p85 = scmp.ne.s32.totalorder %s68, %s84
      %p86 = scmp.eq.s32.totalorder %s39, 0
      %p87 = por %p85, %p86
      %s88 = ssub.s32 %s33, %s40
      %p89 = scmp.eq.s32.totalorder %s88, 0
      %s91 = sadd.s32 %s90, 1
      %s92 = scalar_select %p89, %s90, %s91
      %p95 = pneg %p89
      %p96 = scmp.eq.s32.totalorder %s33, 1
      %p97 = por %p95, %p96
      %p98 = scmp.ne.s32.totalorder %s90, %s93
      %p99 = scmp.eq.s32.totalorder %s33, 0
      %p100 = por %p98, %p99
      %p101 = scmp.ne.s32.totalorder %s90, %s93
      %p102 = scmp.eq.s32.totalorder %s38, 1
      %p103 = por %p101, %p102
      %p104 = scmp.ne.s32.totalorder %s93, %s94
      %p105 = scmp.eq.s32.totalorder %s38, 0
      %p106 = por %p104, %p105
      %p107 = scmp.ne.s32.totalorder %s93, %s94
      %p108 = scmp.eq.s32.totalorder %s39, 1
      %p109 = por %p107, %p108
      %p111 = scmp.ne.s32.totalorder %s94, %s110
      %p112 = scmp.eq.s32.totalorder %s39, 0
      %p113 = por %p111, %p112
      %s114 = ssub.s32 %s33, %s40
      %p115 = scmp.eq.s32.totalorder %s114, 0
      %s117 = sadd.s32 %s116, 1
      %s118 = scalar_select %p115, %s116, %s117
      %p121 = pneg %p115
      %p122 = scmp.eq.s32.totalorder %s33, 1
      %p123 = por %p121, %p122
      %p124 = scmp.ne.s32.totalorder %s116, %s119
      %p125 = scmp.eq.s32.totalorder %s33, 0
      %p126 = por %p124, %p125
      %p127 = scmp.ne.s32.totalorder %s116, %s119
      %p128 = scmp.eq.s32.totalorder %s38, 1
      %p129 = por %p127, %p128
      %p130 = scmp.ne.s32.totalorder %s119, %s120
      %p131 = scmp.eq.s32.totalorder %s38, 0
      %p132 = por %p130, %p131
      %p133 = scmp.ne.s32.totalorder %s119, %s120
      %p134 = scmp.eq.s32.totalorder %s39, 1
      %p135 = por %p133, %p134
      %p137 = scmp.ne.s32.totalorder %s120, %s136
      %p138 = scmp.eq.s32.totalorder %s39, 0
      %p139 = por %p137, %p138
      %p140 = scmp.le.s32.totalorder 1, %s33
      %p141 = scmp.lt.s32.totalorder %s33, 3
      %p142 = pnand %p140, %p141
      %p143 = pneg %p142
      // Predicated region
      $region9: #{tpu_custom_call.1} parent=5 // pred_check
        _
      $region10: #{tpu_custom_call.1} parent=5 // pred_check_branch
        %145 = sbr.rel (%p142) target = $region12
      $region11: #{tpu_custom_call.1} parent=5 // pred_region
        %s146 = ssub.s32 %s33, 1
        // Predicated region
        $region13: #{tpu_custom_call.1} parent=11 // pred_check
          %p147 = pneg %p54
        $region14: #{tpu_custom_call.1} parent=11 // pred_check_branch
          %149 = sbr.rel (%p147) target = $region16
        $region15: #{tpu_custom_call.1} parent=11 // pred_region
          %s151 = ssub.s32 256, 256
          %152 = vsyncadd [#allocation8], %s151
          %s153 = sshll.u32 [#allocation7], 4
          %s154 = int_to_ptr.vmem [resolvable:$true] %s153
          %159 = dma.hbm_to_vmem [thread:$0]  %s4, 256, %s154, [#allocation8], 128, 128, 8
        $region16: #{tpu_custom_call.1} parent=11 // pred_fallthru
          _
      $region12: #{tpu_custom_call.1} parent=5 // pred_fallthru
        _
      %p160 = scmp.lt.s32.totalorder %s33, 2
      // Predicated region
      $region17: #{tpu_custom_call.1} parent=5 // pred_check
        %p161 = pneg %p160
      $region18: #{tpu_custom_call.1} parent=5 // pred_check_branch
        %163 = sbr.rel (%p161) target = $region20
      $region19: #{tpu_custom_call.1} parent=5 // pred_region
        _
      $region20: #{tpu_custom_call.1} parent=5 // pred_fallthru
        _
      %p164 = scmp.le.s32.totalorder 1, %s33
      %p165 = scmp.lt.s32.totalorder %s33, 3
      %p166 = pnand %p164, %p165
      %p167 = pneg %p166
      // Predicated region
      $region21: #{tpu_custom_call.1} parent=5 // pred_check
        _
      $region22: #{tpu_custom_call.1} parent=5 // pred_check_branch
        %169 = sbr.rel (%p166) target = $region24
      $region23: #{tpu_custom_call.1} parent=5 // pred_region
        %s170 = ssub.s32 %s33, 1
        // Predicated region
        $region25: #{tpu_custom_call.1} parent=23 // pred_check
          %p171 = pneg %p54
        $region26: #{tpu_custom_call.1} parent=23 // pred_check_branch
          %173 = sbr.rel (%p171) target = $region28
        $region27: #{tpu_custom_call.1} parent=23 // pred_region
          %174 = dma.done [#allocation8], 256
        $region28: #{tpu_custom_call.1} parent=23 // pred_fallthru
          _
        %p175 = pneg %p54
        %p176 = pneg %p51
        %p177 = pneg %p80
        %p178 = pneg %p77
        %s179 = sand.u32 %s67, 1
        %s180 = scalar_lea.sflag [#allocation9], %s179
        %s181 = sand.u32 %s67, 1
        %s182 = smul.addr %s181, 32
        %s183 = scalar_lea.vmem [#allocation10], %s182
        %p184 = pneg %p106
        %p185 = pneg %p103
        %s186 = sand.u32 %s38, 1
        %s187 = scalar_lea.sflag [#allocation12], %s186
        %s188 = sand.u32 %s93, 1
        %s189 = smul.addr %s188, 32
        %s190 = scalar_lea.vmem [#allocation11], %s189
        %p191 = pneg %p132
        %p192 = pneg %p129
        %s193 = sand.u32 %s38, 1
        %s194 = scalar_lea.sflag [#allocation12], %s193
        %s195 = sand.u32 %s119, 1
        %s196 = smul.addr %s195, 32
        %s197 = scalar_lea.vmem [#allocation13], %s196
        %s198 = smul.u32 4, %s38
        %s199 = smul.u32 4, %s38
        %s200 = smul.u32 4, %s38
        %s201 = smul.u32 %s38, 32
        loop: start=0, step=1, limit=16
        $region29: #{tpu_custom_call.1} parent=23 // loop_pre_header
          _
        $region30: #{tpu_custom_call.1} parent=23 // loop_header
          %s203 = sphi 0, %s207
          %p204 = scmp.ge.s32.totalorder %s203, 16
        $region31: #{tpu_custom_call.1} parent=23 // loop_header_branch
          %206 = sbr.rel (%p204) target = $region35
        $region32: #{tpu_custom_call.1} parent=23 // loop_body
          %p208 = scmp.lt.s32.totalorder %s203, 0
          %s209 = ssub.s32 0, %s203
          %s210 = scalar_select %p208, %s209, %s203
          %s211 = sand.u32 %s210, 15
          %s212 = ssub.s32 0, %s211
          %s213 = scalar_select %p208, %s212, %s211
          %p214 = scmp.ne.s32.totalorder %s213, 0
          %p215 = scmp.lt.s32.totalorder %s213, 0
          %p216 = pnand %p215, %p214
          %p217 = pneg %p216
          %s218 = sadd.s32 %s213, 16
          %s219 = scalar_select %p217, %s218, %s213
          %s220 = sadd.s32 %s201, %s203
          %s221 = sld [smem:[#allocation4 + %s220]]
          %s222 = sld [smem:[#allocation6 + %s220]]
          %s223 = smul.addr %s221, 16
          %s224 = scalar_lea.hbm %s3, %s223
          %s225 = scalar_lea.vmem %s183, %s203 [#allocation10]
          %s226 = scalar_lea.sflag [#allocation2], %s219
          // Predicated region
          $region36: #{tpu_custom_call.1} parent=32 // pred_check
            _
          $region37: #{tpu_custom_call.1} parent=32 // pred_check_branch
            %228 = sbr.rel target = $region39
          $region38: #{tpu_custom_call.1} parent=32 // pred_region
            %229 = sst [smem:[#allocation16]] [#allocation15]
            %230 = sst [smem:[#allocation17]] [#allocation14]
          $region39: #{tpu_custom_call.1} parent=32 // pred_fallthru
            _
          %232 = shalt.err (0)
          %s234 = sshll.u32 %s225, 4
          %s235 = int_to_ptr.vmem [resolvable:$true] %s234
          %237 = dma.hbm_to_vmem [thread:$0]  %s224, 16, %s235, %s226
          %s238 = smul.addr %s222, 16
          %s239 = scalar_lea.hbm %s3, %s238
          %s240 = scalar_lea.vmem %s197, %s203 [#allocation13]
          %s241 = sadd.s32 %s219, 16
          %s242 = scalar_lea.sflag [#allocation2], %s241
          // Predicated region
          $region40: #{tpu_custom_call.1} parent=32 // pred_check
            _
          $region41: #{tpu_custom_call.1} parent=32 // pred_check_branch
            %244 = sbr.rel target = $region43
          $region42: #{tpu_custom_call.1} parent=32 // pred_region
            %245 = sst [smem:[#allocation16]] [#allocation19]
            %246 = sst [smem:[#allocation17]] [#allocation18]
          $region43: #{tpu_custom_call.1} parent=32 // pred_fallthru
            _
          %248 = shalt.err (0)
          %s250 = sshll.u32 %s240, 4
          %s251 = int_to_ptr.vmem [resolvable:$true] %s250
          %253 = dma.hbm_to_vmem [thread:$0]  %s239, 16, %s251, %s242
        $region33: #{tpu_custom_call.1} parent=23 // loop_footer
          %s207 = sadd.s32 1, %s203
        $region34: #{tpu_custom_call.1} parent=23 // loop_footer_branch
          %202 = sbr.rel target = $region30
        $region35: #{tpu_custom_call.1} parent=23 // loop_exit
          _
        loop: start=0, step=1, limit=32
        $region44: #{tpu_custom_call.1} parent=23 // loop_pre_header
          _
        $region45: #{tpu_custom_call.1} parent=23 // loop_header
          %s255 = sphi 0, %s259
          %p256 = scmp.ge.s32.totalorder %s255, 32
        $region46: #{tpu_custom_call.1} parent=23 // loop_header_branch
          %258 = sbr.rel (%p256) target = $region50
        $region47: #{tpu_custom_call.1} parent=23 // loop_body
          %p260 = scmp.lt.s32.totalorder %s255, 0
          %s261 = ssub.s32 0, %s255
          %s262 = scalar_select %p260, %s261, %s255
          %s263 = sand.u32 %s262, 15
          %s264 = ssub.s32 0, %s263
          %s265 = scalar_select %p260, %s264, %s263
          %p266 = scmp.ne.s32.totalorder %s265, 0
          %p267 = scmp.lt.s32.totalorder %s265, 0
          %p268 = pnand %p267, %p266
          %p269 = pneg %p268
          %s270 = sadd.s32 %s265, 16
          %s271 = scalar_select %p269, %s270, %s265
          %s272 = scalar_lea.sflag [#allocation2], %s271
          %s273 = smul.u32 1, 1
          %s274 = sshll.u32 %s273, 4
          %275 = dma.done %s272, %s274
          %s276 = sadd.s32 %s271, 16
          %s277 = scalar_lea.sflag [#allocation2], %s276
          %s278 = sshll.u32 %s273, 4
          %279 = dma.done %s277, %s278
          %s280 = sadd.s32 %s255, 16
          %p281 = scmp.lt.s32.totalorder %s280, 32
          // Predicated region
          $region51: #{tpu_custom_call.1} parent=47 // pred_check
            %p282 = pneg %p281
          $region52: #{tpu_custom_call.1} parent=47 // pred_check_branch
            %284 = sbr.rel (%p282) target = $region54
          $region53: #{tpu_custom_call.1} parent=47 // pred_region
            %p285 = scmp.lt.s32.totalorder %s280, 0
            %s286 = ssub.s32 0, %s280
            %s287 = scalar_select %p285, %s286, %s280
            %s288 = sand.u32 %s287, 15
            %s289 = ssub.s32 0, %s288
            %s290 = scalar_select %p285, %s289, %s288
            %p291 = scmp.ne.s32.totalorder %s290, 0
            %p292 = scmp.lt.s32.totalorder %s290, 0
            %p293 = pnand %p292, %p291
            %p294 = pneg %p293
            %s295 = sadd.s32 %s290, 16
            %s296 = scalar_select %p294, %s295, %s290
            %s297 = sadd.s32 %s201, %s280
            %s298 = sld [smem:[#allocation4 + %s297]]
            %s299 = sld [smem:[#allocation6 + %s297]]
            %s300 = smul.addr %s298, 16
            %s301 = scalar_lea.hbm %s3, %s300
            %s302 = scalar_lea.vmem %s183, %s280 [#allocation10]
            %s303 = scalar_lea.sflag [#allocation2], %s296
            // Predicated region
            $region55: #{tpu_custom_call.1} parent=53 // pred_check
              _
            $region56: #{tpu_custom_call.1} parent=53 // pred_check_branch
              %305 = sbr.rel target = $region58
            $region57: #{tpu_custom_call.1} parent=53 // pred_region
              %306 = sst [smem:[#allocation16]] [#allocation21]
              %307 = sst [smem:[#allocation17]] [#allocation20]
            $region58: #{tpu_custom_call.1} parent=53 // pred_fallthru
              _
            %309 = shalt.err (0)
            %s311 = sshll.u32 %s302, 4
            %s312 = int_to_ptr.vmem [resolvable:$true] %s311
            %314 = dma.hbm_to_vmem [thread:$0]  %s301, 16, %s312, %s303
            %s315 = smul.addr %s299, 16
            %s316 = scalar_lea.hbm %s3, %s315
            %s317 = scalar_lea.vmem %s197, %s280 [#allocation13]
            %s318 = sadd.s32 %s296, 16
            %s319 = scalar_lea.sflag [#allocation2], %s318
            // Predicated region
            $region59: #{tpu_custom_call.1} parent=53 // pred_check
              _
            $region60: #{tpu_custom_call.1} parent=53 // pred_check_branch
              %321 = sbr.rel target = $region62
            $region61: #{tpu_custom_call.1} parent=53 // pred_region
              %322 = sst [smem:[#allocation16]] [#allocation23]
              %323 = sst [smem:[#allocation17]] [#allocation22]
            $region62: #{tpu_custom_call.1} parent=53 // pred_fallthru
              _
            %325 = shalt.err (0)
            %s327 = sshll.u32 %s317, 4
            %s328 = int_to_ptr.vmem [resolvable:$true] %s327
            %330 = dma.hbm_to_vmem [thread:$0]  %s316, 16, %s328, %s319
          $region54: #{tpu_custom_call.1} parent=47 // pred_fallthru
            _
          %s331 = sadd.s32 %s201, %s255
          %s332 = sld [smem:[#allocation5 + %s331]]
          %s333 = scalar_lea.vmem [#allocation7], %s332
          %v334 = vld [vmem:[%s333] sm:$0x1]
          %s335 = scalar_lea.vmem %s190, %s255 [#allocation11]
          %336 = vst [vmem:[%s335] sm:$0x1] %v334
        $region48: #{tpu_custom_call.1} parent=23 // loop_footer
          %s259 = sadd.s32 1, %s255
        $region49: #{tpu_custom_call.1} parent=23 // loop_footer_branch
          %254 = sbr.rel target = $region45
        $region50: #{tpu_custom_call.1} parent=23 // loop_exit
          _
        %s337 = sand.u32 %s67, 1
        %s338 = scalar_lea.sflag [#allocation9], %s337
        %s339 = sand.u32 %s67, 1
        %s340 = smul.addr %s339, 32
        %s341 = scalar_lea.vmem [#allocation10], %s340
        %s342 = sand.u32 %s38, 1
        %s343 = scalar_lea.sflag [#allocation12], %s342
        %s344 = sand.u32 %s93, 1
        %s345 = smul.addr %s344, 32
        %s346 = scalar_lea.vmem [#allocation11], %s345
        %s347 = sand.u32 %s38, 1
        %s348 = scalar_lea.sflag [#allocation12], %s347
        %s349 = sand.u32 %s119, 1
        %s350 = smul.addr %s349, 32
        %s351 = scalar_lea.vmem [#allocation13], %s350
        // Predicated region
        $region63: #{tpu_custom_call.1} parent=23 // pred_check
          %p352 = pneg %p77
        $region64: #{tpu_custom_call.1} parent=23 // pred_check_branch
          %354 = sbr.rel (%p352) target = $region66
        $region65: #{tpu_custom_call.1} parent=23 // pred_region
          %s355 = smul.u32 4, %s38
          %s357 = ssub.s32 512, 512
          %358 = vsyncadd %s338, %s357
          %s359 = smul.addr %s355, 128
          %s360 = scalar_lea.hbm %s5, %s359
          %s361 = sshll.u32 %s341, 4
          %s362 = int_to_ptr.vmem [resolvable:$true] %s361
          %367 = dma.vmem_to_hbm [thread:$0]  %s362, 512, %s360, %s338, 128, 128, 8
        $region66: #{tpu_custom_call.1} parent=23 // pred_fallthru
          _
        // Predicated region
        $region67: #{tpu_custom_call.1} parent=23 // pred_check
          %p368 = pneg %p103
        $region68: #{tpu_custom_call.1} parent=23 // pred_check_branch
          %370 = sbr.rel (%p368) target = $region70
        $region69: #{tpu_custom_call.1} parent=23 // pred_region
          %s371 = smul.u32 4, %s38
          %s373 = ssub.s32 512, 512
          %374 = vsyncadd %s343, %s373
          %s375 = smul.addr %s371, 128
          %s376 = scalar_lea.hbm %s6, %s375
          %s377 = sshll.u32 %s346, 4
          %s378 = int_to_ptr.vmem [resolvable:$true] %s377
          %383 = dma.vmem_to_hbm [thread:$0]  %s378, 512, %s376, %s343, 128, 128, 8
        $region70: #{tpu_custom_call.1} parent=23 // pred_fallthru
          _
        // Predicated region
        $region71: #{tpu_custom_call.1} parent=23 // pred_check
          %p384 = pneg %p129
        $region72: #{tpu_custom_call.1} parent=23 // pred_check_branch
          %386 = sbr.rel (%p384) target = $region74
        $region73: #{tpu_custom_call.1} parent=23 // pred_region
          %s387 = smul.u32 4, %s38
          %s389 = ssub.s32 512, 512
          %390 = vsyncadd %s348, %s389
          %s391 = smul.addr %s387, 128
          %s392 = scalar_lea.hbm %s7, %s391
          %s393 = sshll.u32 %s351, 4
          %s394 = int_to_ptr.vmem [resolvable:$true] %s393
          %399 = dma.vmem_to_hbm [thread:$0]  %s394, 512, %s392, %s348, 128, 128, 8
        $region74: #{tpu_custom_call.1} parent=23 // pred_fallthru
          _
      $region24: #{tpu_custom_call.1} parent=5 // pred_fallthru
        _
      %p400 = scmp.le.s32.totalorder 2, %s33
      // Predicated region
      $region75: #{tpu_custom_call.1} parent=5 // pred_check
        %p401 = pneg %p400
      $region76: #{tpu_custom_call.1} parent=5 // pred_check_branch
        %403 = sbr.rel (%p401) target = $region78
      $region77: #{tpu_custom_call.1} parent=5 // pred_region
        %s404 = ssub.s32 %s33, 2
        // Predicated region
        $region79: #{tpu_custom_call.1} parent=77 // pred_check
          %p405 = pneg %p83
        $region80: #{tpu_custom_call.1} parent=77 // pred_check_branch
          %407 = sbr.rel (%p405) target = $region82
        $region81: #{tpu_custom_call.1} parent=77 // pred_region
          %s408 = sand.u32 %s68, 1
          %s409 = scalar_lea.sflag [#allocation9], %s408
          %s410 = sand.u32 %s68, 1
          %s411 = smul.addr %s410, 32
          %s412 = scalar_lea.vmem [#allocation10], %s411
          %413 = dma.done %s409, 512
        $region82: #{tpu_custom_call.1} parent=77 // pred_fallthru
          _
        // Predicated region
        $region83: #{tpu_custom_call.1} parent=77 // pred_check
          %p414 = pneg %p109
        $region84: #{tpu_custom_call.1} parent=77 // pred_check_branch
          %416 = sbr.rel (%p414) target = $region86
        $region85: #{tpu_custom_call.1} parent=77 // pred_region
          %s417 = sand.u32 %s39, 1
          %s418 = scalar_lea.sflag [#allocation12], %s417
          %s419 = sand.u32 %s94, 1
          %s420 = smul.addr %s419, 32
          %s421 = scalar_lea.vmem [#allocation11], %s420
          %422 = dma.done %s418, 512
        $region86: #{tpu_custom_call.1} parent=77 // pred_fallthru
          _
        // Predicated region
        $region87: #{tpu_custom_call.1} parent=77 // pred_check
          %p423 = pneg %p135
        $region88: #{tpu_custom_call.1} parent=77 // pred_check_branch
          %425 = sbr.rel (%p423) target = $region90
        $region89: #{tpu_custom_call.1} parent=77 // pred_region
          %s426 = sand.u32 %s39, 1
          %s427 = scalar_lea.sflag [#allocation12], %s426
          %s428 = sand.u32 %s120, 1
          %s429 = smul.addr %s428, 32
          %s430 = scalar_lea.vmem [#allocation13], %s429
          %431 = dma.done %s427, 512
        $region90: #{tpu_custom_call.1} parent=77 // pred_fallthru
          _
      $region78: #{tpu_custom_call.1} parent=5 // pred_fallthru
        _
    $region6: #{tpu_custom_call.1} parent=1 // loop_footer
      %s37 = sadd.s32 1, %s33
    $region7: #{tpu_custom_call.1} parent=1 // loop_footer_branch
      %32 = sbr.rel target = $region3
    $region8: #{tpu_custom_call.1} parent=1 // loop_exit
      _
    %432 = vsyncpa [#allocation8], 1
    %s433 = scalar_lea.sflag [#allocation8], 1
    %434 = vsyncpa %s433, 1
    %435 = vsyncpa [#allocation9], 1
    %s436 = scalar_lea.sflag [#allocation9], 1
    %437 = vsyncpa %s436, 1
    %438 = vsyncpa [#allocation12], 1
    %s439 = scalar_lea.sflag [#allocation12], 1
    %440 = vsyncpa %s439, 1
  %441 = vsyncmov [#allocation2]
  %s442 = vpop.sfrf %441
  %p443 = scmp.eq.s32.totalorder %s442, 0
  %p444 = pneg %p443
  %446 = shalt.err (%p444)
  %s447 = scalar_lea.sflag [#allocation2], 1
  %448 = vsyncmov %s447
  %s449 = vpop.sfrf %448
  %p450 = scmp.eq.s32.totalorder %s449, 0
  %p451 = pneg %p450
  %453 = shalt.err (%p451)
  %s454 = scalar_lea.sflag [#allocation2], 2
  %455 = vsyncmov %s454
  %s456 = vpop.sfrf %455
  %p457 = scmp.eq.s32.totalorder %s456, 0
  %p458 = pneg %p457
  %460 = shalt.err (%p458)
  %s461 = scalar_lea.sflag [#allocation2], 3
  %462 = vsyncmov %s461
  %s463 = vpop.sfrf %462
  %p464 = scmp.eq.s32.totalorder %s463, 0
  %p465 = pneg %p464
  %467 = shalt.err (%p465)
  %s468 = scalar_lea.sflag [#allocation2], 4
  %469 = vsyncmov %s468
  %s470 = vpop.sfrf %469
  %p471 = scmp.eq.s32.totalorder %s470, 0
  %p472 = pneg %p471
  %474 = shalt.err (%p472)
  %s475 = scalar_lea.sflag [#allocation2], 5
  %476 = vsyncmov %s475
  %s477 = vpop.sfrf %476
  %p478 = scmp.eq.s32.totalorder %s477, 0
  %p479 = pneg %p478
  %481 = shalt.err (%p479)
  %s482 = scalar_lea.sflag [#allocation2], 6
  %483 = vsyncmov %s482
  %s484 = vpop.sfrf %483
  %p485 = scmp.eq.s32.totalorder %s484, 0
  %p486 = pneg %p485
  %488 = shalt.err (%p486)
  %s489 = scalar_lea.sflag [#allocation2], 7
  %490 = vsyncmov %s489
  %s491 = vpop.sfrf %490
  %p492 = scmp.eq.s32.totalorder %s491, 0
  %p493 = pneg %p492
  %495 = shalt.err (%p493)
  %s496 = scalar_lea.sflag [#allocation2], 8
  %497 = vsyncmov %s496
  %s498 = vpop.sfrf %497
  %p499 = scmp.eq.s32.totalorder %s498, 0
  %p500 = pneg %p499
  %502 = shalt.err (%p500)
  %s503 = scalar_lea.sflag [#allocation2], 9
  %504 = vsyncmov %s503
  %s505 = vpop.sfrf %504
  %p506 = scmp.eq.s32.totalorder %s505, 0
  %p507 = pneg %p506
  %509 = shalt.err (%p507)
  %s510 = scalar_lea.sflag [#allocation2], 10
  %511 = vsyncmov %s510
  %s512 = vpop.sfrf %511
  %p513 = scmp.eq.s32.totalorder %s512, 0
  %p514 = pneg %p513
  %516 = shalt.err (%p514)
  %s517 = scalar_lea.sflag [#allocation2], 11
  %518 = vsyncmov %s517
  %s519 = vpop.sfrf %518
  %p520 = scmp.eq.s32.totalorder %s519, 0
  %p521 = pneg %p520
  %523 = shalt.err (%p521)
  %s524 = scalar_lea.sflag [#allocation2], 12
  %525 = vsyncmov %s524
  %s526 = vpop.sfrf %525
  %p527 = scmp.eq.s32.totalorder %s526, 0
  %p528 = pneg %p527
  %530 = shalt.err (%p528)
  %s531 = scalar_lea.sflag [#allocation2], 13
  %532 = vsyncmov %s531
  %s533 = vpop.sfrf %532
  %p534 = scmp.eq.s32.totalorder %s533, 0
  %p535 = pneg %p534
  %537 = shalt.err (%p535)
  %s538 = scalar_lea.sflag [#allocation2], 14
  %539 = vsyncmov %s538
  %s540 = vpop.sfrf %539
  %p541 = scmp.eq.s32.totalorder %s540, 0
  %p542 = pneg %p541
  %544 = shalt.err (%p542)
  %s545 = scalar_lea.sflag [#allocation2], 15
  %546 = vsyncmov %s545
  %s547 = vpop.sfrf %546
  %p548 = scmp.eq.s32.totalorder %s547, 0
  %p549 = pneg %p548
  %551 = shalt.err (%p549)
  %s552 = scalar_lea.sflag [#allocation2], 16
  %553 = vsyncmov %s552
  %s554 = vpop.sfrf %553
  %p555 = scmp.eq.s32.totalorder %s554, 0
  %p556 = pneg %p555
  %558 = shalt.err (%p556)
  %s559 = scalar_lea.sflag [#allocation2], 17
  %560 = vsyncmov %s559
  %s561 = vpop.sfrf %560
  %p562 = scmp.eq.s32.totalorder %s561, 0
  %p563 = pneg %p562
  %565 = shalt.err (%p563)
  %s566 = scalar_lea.sflag [#allocation2], 18
  %567 = vsyncmov %s566
  %s568 = vpop.sfrf %567
  %p569 = scmp.eq.s32.totalorder %s568, 0
  %p570 = pneg %p569
  %572 = shalt.err (%p570)
  %s573 = scalar_lea.sflag [#allocation2], 19
  %574 = vsyncmov %s573
  %s575 = vpop.sfrf %574
  %p576 = scmp.eq.s32.totalorder %s575, 0
  %p577 = pneg %p576
  %579 = shalt.err (%p577)
  %s580 = scalar_lea.sflag [#allocation2], 20
  %581 = vsyncmov %s580
  %s582 = vpop.sfrf %581
  %p583 = scmp.eq.s32.totalorder %s582, 0
  %p584 = pneg %p583
  %586 = shalt.err (%p584)
  %s587 = scalar_lea.sflag [#allocation2], 21
  %588 = vsyncmov %s587
  %s589 = vpop.sfrf %588
  %p590 = scmp.eq.s32.totalorder %s589, 0
  %p591 = pneg %p590
  %593 = shalt.err (%p591)
  %s594 = scalar_lea.sflag [#allocation2], 22
  %595 = vsyncmov %s594
  %s596 = vpop.sfrf %595
  %p597 = scmp.eq.s32.totalorder %s596, 0
  %p598 = pneg %p597
  %600 = shalt.err (%p598)
  %s601 = scalar_lea.sflag [#allocation2], 23
  %602 = vsyncmov %s601
  %s603 = vpop.sfrf %602
  %p604 = scmp.eq.s32.totalorder %s603, 0
  %p605 = pneg %p604
  %607 = shalt.err (%p605)
  %s608 = scalar_lea.sflag [#allocation2], 24
  %609 = vsyncmov %s608
  %s610 = vpop.sfrf %609
  %p611 = scmp.eq.s32.totalorder %s610, 0
  %p612 = pneg %p611
  %614 = shalt.err (%p612)
  %s615 = scalar_lea.sflag [#allocation2], 25
  %616 = vsyncmov %s615
  %s617 = vpop.sfrf %616
  %p618 = scmp.eq.s32.totalorder %s617, 0
  %p619 = pneg %p618
  %621 = shalt.err (%p619)
  %s622 = scalar_lea.sflag [#allocation2], 26
  %623 = vsyncmov %s622
  %s624 = vpop.sfrf %623
  %p625 = scmp.eq.s32.totalorder %s624, 0
  %p626 = pneg %p625
  %628 = shalt.err (%p626)
  %s629 = scalar_lea.sflag [#allocation2], 27
  %630 = vsyncmov %s629
  %s631 = vpop.sfrf %630
  %p632 = scmp.eq.s32.totalorder %s631, 0
  %p633 = pneg %p632
  %635 = shalt.err (%p633)
  %s636 = scalar_lea.sflag [#allocation2], 28
  %637 = vsyncmov %s636
  %s638 = vpop.sfrf %637
  %p639 = scmp.eq.s32.totalorder %s638, 0
  %p640 = pneg %p639
  %642 = shalt.err (%p640)
  %s643 = scalar_lea.sflag [#allocation2], 29
  %644 = vsyncmov %s643
  %s645 = vpop.sfrf %644
  %p646 = scmp.eq.s32.totalorder %s645, 0
  %p647 = pneg %p646
  %649 = shalt.err (%p647)
  %s650 = scalar_lea.sflag [#allocation2], 30
  %651 = vsyncmov %s650
  %s652 = vpop.sfrf %651
  %p653 = scmp.eq.s32.totalorder %s652, 0
  %p654 = pneg %p653
  %656 = shalt.err (%p654)
  %s657 = scalar_lea.sflag [#allocation2], 31
  %658 = vsyncmov %s657
  %s659 = vpop.sfrf %658
  %p660 = scmp.eq.s32.totalorder %s659, 0
  %p661 = pneg %p660
  %663 = shalt.err (%p661)

</llo_original>
